<compile_context>
chip_gen: v7x
topology: tpu7x:2x2x1
jax: 0.10.0
libtpu: 0.0.40
codegen_flags: <defaults>
</compile_context>

<pallas_src>
import functools

import jax
import jax.numpy as jnp
from jax.experimental import pallas as pl
from jax.experimental.pallas import tpu as pltpu


def _discrete_ce_kernel(x_ref, gt_ref, out_ref, *, n_classes, scale,
                        mask_pixels, n_valid_pixels, tile_rows, lanes):
    # x_ref  : (1, C, TS, L) logits tile (original input dtype)
    # gt_ref : (1, TS, L)    continuous ground-truth tile
    # out_ref: (1, TS, 1)    per-row partial sums of the cross-entropy (f32)
    #
    # Precondition (as in PyTorch, where out-of-range targets would raise):
    # 0 <= int(gt * scale) < n_classes for every valid pixel.
    tgt = (gt_ref[0].astype(jnp.float32) * jnp.float32(scale)).astype(jnp.int32)

    # Running max over the class planes in the input dtype (native bf16 VPU max
    # on v6e/v7x); cast to f32 once instead of once per class per pass.
    m_in = x_ref[0, 0]
    for c in range(1, n_classes):
        m_in = jnp.maximum(m_in, x_ref[0, c])
    m = m_in.astype(jnp.float32)

    # `diff = x_c - m` is reused for both the exp (EUP) and the target pick
    # (compare + select) -> ~4 VALU ops per class element.
    # TODO(synk): for very large class counts (C >~ 64) switch these unrolled
    # loops to lax.fori_loop(..., unroll=4) to bound instruction-stream size
    # and vreg pressure.
    s = jnp.zeros_like(m)
    picked = jnp.zeros_like(m)
    for c in range(n_classes):
        diff = x_ref[0, c].astype(jnp.float32) - m
        s = s + jnp.exp(diff)
        picked = jnp.where(tgt == c, diff, picked)

    loss = jnp.log(s) - picked          # = logsumexp(x) - x[target], per pixel

    if mask_pixels:
        # Zero the padded tail pixels so they do not contribute to the sum.
        t = pl.program_id(1)
        row = jax.lax.broadcasted_iota(jnp.int32, (tile_rows, lanes), 0)
        lane = jax.lax.broadcasted_iota(jnp.int32, (tile_rows, lanes), 1)
        pix = (t * tile_rows + row) * lanes + lane
        loss = jnp.where(pix < n_valid_pixels, loss, jnp.float32(0.0))

    # Cross-lane reduce (XLU, free slot): per-row partial sums -> tiny output.
    out_ref[0] = jnp.sum(loss, axis=1, keepdims=True)


def discrete_ce_loss(x, gt, granularity):
    """Discrete_CELoss.forward.

    x : (B, C, H, W) logits over C discretized bins.
    gt: (1, B, H, W) continuous targets; class = int(gt * granularity/10), [0].
    Returns scalar f32 mean cross-entropy (PyTorch CrossEntropyLoss default).

    Note: multiply-then-truncate in f32 may differ from PyTorch by one bin when
    gt*scale lands exactly on an integer boundary (f32 rounding of the scale).
    """
    scale = float(granularity) / 10.0
    B, C, H, W = x.shape
    tgt_src = gt[0]                      # the `[0]` in the PyTorch module -> (B, H, W)

    P = H * W
    L = 128
    if P % L == 0:
        P_pad = P                        # already lane-aligned: free reshape only
    else:
        P_pad = ((P + 1023) // 1024) * 1024   # pad to a full (8,128)-slab multiple
    mask_pixels = P_pad != P

    x_flat = x.reshape(B, C, P)
    g_flat = tgt_src.reshape(B, P)
    if mask_pixels:
        x_flat = jnp.pad(x_flat, ((0, 0), (0, 0), (0, P_pad - P)))
        g_flat = jnp.pad(g_flat, ((0, 0), (0, P_pad - P)))
    S = P_pad // L
    xs = x_flat.reshape(B, C, S, L)      # original dtype kept, contiguous reshapes
    gs = g_flat.reshape(B, S, L)

    # Pixel-tile height: power-of-two multiple of 8 dividing S, capped at 64
    # sublanes and ~4 MiB of logits per block (double-buffered footprint stays
    # well inside v7x's 64 MiB VMEM; accumulators m/s/picked/tgt stay far under
    # the 64-vreg budget).
    itemsize = jnp.dtype(x.dtype).itemsize
    if S % 8 == 0:
        byte_cap = 4 * 1024 * 1024
        ts_cap = max(8, min(64, byte_cap // max(1, C * L * itemsize)))
        TS = 8
        while TS * 2 <= ts_cap and S % (TS * 2) == 0:
            TS *= 2
        # Keep >=2 grid steps on the parallel axes so both v7x TensorCores work.
        while B * (S // TS) < 2 and TS > 8 and (TS // 2) % 8 == 0:
            TS //= 2
    else:
        TS = S   # only when P % 128 == 0 with S < 8: block == full extent (allowed)

    kernel = functools.partial(
        _discrete_ce_kernel, n_classes=C, scale=scale,
        mask_pixels=mask_pixels, n_valid_pixels=P, tile_rows=TS, lanes=L)

    partial_sums = pl.pallas_call(
        kernel,
        out_shape=jax.ShapeDtypeStruct((B, S, 1), jnp.float32),
        grid_spec=pltpu.PrefetchScalarGridSpec(
            num_scalar_prefetch=0,
            grid=(B, S // TS),
            in_specs=[
                pl.BlockSpec((1, C, TS, L), lambda b, t: (b, 0, t, 0)),
                pl.BlockSpec((1, TS, L), lambda b, t: (b, t, 0)),
            ],
            out_specs=pl.BlockSpec((1, TS, 1), lambda b, t: (b, t, 0)),
        ),
        compiler_params=pltpu.CompilerParams(
            dimension_semantics=("parallel", "parallel"),
            vmem_limit_bytes=48 * 1024 * 1024,
        ),
    )(xs, gs)

    # CrossEntropyLoss default reduction: mean over every (true) pixel.
    return jnp.sum(partial_sums) / jnp.float32(B * P)


def _reference_loss(x, gt, granularity):
    # Pure-JAX reference mirroring the PyTorch forward exactly.
    scale = granularity / 10.0
    tgt = (gt * scale).astype(jnp.int32)[0]                  # (B, H, W)
    logits = jnp.moveaxis(x, 1, -1).astype(jnp.float32)      # (B, H, W, C)
    lse = jax.scipy.special.logsumexp(logits, axis=-1)
    picked = jnp.take_along_axis(logits, tgt[..., None], axis=-1)[..., 0]
    return jnp.mean(lse - picked)


if __name__ == "__main__":
    key = jax.random.PRNGKey(0)
    kx, kg, kx2, kg2 = jax.random.split(key, 4)

    granularity = 40                      # module init arg -> scale = 4.0
    scale = granularity / 10.0

    # Check 1: lane-aligned spatial plane (H*W % 128 == 0).
    B, C, H, W = 2, 16, 16, 16            # C = number of discretized bins
    x = jax.random.normal(kx, (B, C, H, W), dtype=jnp.float32)
    # Continuous ground truth in [0, C/scale) so int(gt * scale) lands in [0, C).
    gt = jax.random.uniform(kg, (1, B, H, W), dtype=jnp.float32,
                            minval=0.0, maxval=C / scale)
    loss = jax.block_until_ready(discrete_ce_loss(x, gt, granularity))
    ref = jax.block_until_ready(_reference_loss(x, gt, granularity))
    assert jnp.allclose(loss, ref, rtol=1e-5, atol=1e-5), (loss, ref)

    # Check 2: ragged plane (H*W % 128 != 0) exercises the pad + mask path.
    B2, C2, H2, W2 = 2, 8, 9, 11
    x2 = jax.random.normal(kx2, (B2, C2, H2, W2), dtype=jnp.float32)
    gt2 = jax.random.uniform(kg2, (1, B2, H2, W2), dtype=jnp.float32,
                             minval=0.0, maxval=C2 / scale)
    loss2 = jax.block_until_ready(discrete_ce_loss(x2, gt2, granularity))
    ref2 = jax.block_until_ready(_reference_loss(x2, gt2, granularity))
    assert jnp.allclose(loss2, ref2, rtol=1e-5, atol=1e-5), (loss2, ref2)

    print("KERNEL_OK")
</pallas_src>

<mosaic_0001>
module attributes {stable_mosaic.version = 11 : i64} {
  func.func @_discrete_ce_kernel(%arg0: i32, %arg1: i32, %arg2: memref<1x16x2x128xf32, #tpu.memory_space<vmem>>, %arg3: memref<1x2x128xf32, #tpu.memory_space<vmem>>, %arg4: memref<1x2x1xf32, #tpu.memory_space<vmem>>) attributes {dimension_semantics = [#tpu.dimension_semantics<parallel>, #tpu.dimension_semantics<parallel>], iteration_bounds = array<i64: 2, 1>, scalar_prefetch = 0 : i64, scratch_operands = 0 : i64, tpu.core_type = #tpu.core_type<tc>, window_params = [{transform_indices = @transform_0, window_bounds = array<i64: 1, 16, 2, 128>}, {transform_indices = @transform_1, window_bounds = array<i64: 1, 2, 128>}, {transform_indices = @transform_2, window_bounds = array<i64: 1, 2, 1>}]} {
    %c0 = arith.constant 0 : index
    %c0_0 = arith.constant 0 : index
    %c0_1 = arith.constant 0 : index
    %0 = vector.load %arg3[%c0, %c0_0, %c0_1] : memref<1x2x128xf32, #tpu.memory_space<vmem>>, vector<1x2x128xf32>
    %1 = vector.shape_cast %0 : vector<1x2x128xf32> to vector<2x128xf32>
    %cst = arith.constant 4.000000e+00 : f32
    %2 = vector.broadcast %cst : f32 to vector<2x128xf32>
    %3 = arith.mulf %1, %2 : vector<2x128xf32>
    %4 = arith.fptosi %3 : vector<2x128xf32> to vector<2x128xi32>
    %c0_2 = arith.constant 0 : index
    %c0_3 = arith.constant 0 : index
    %c0_4 = arith.constant 0 : index
    %c0_5 = arith.constant 0 : index
    %5 = vector.load %arg2[%c0_2, %c0_3, %c0_4, %c0_5] : memref<1x16x2x128xf32, #tpu.memory_space<vmem>>, vector<1x1x2x128xf32>
    %6 = vector.shape_cast %5 : vector<1x1x2x128xf32> to vector<2x128xf32>
    %c0_6 = arith.constant 0 : index
    %c1 = arith.constant 1 : index
    %c0_7 = arith.constant 0 : index
    %c0_8 = arith.constant 0 : index
    %7 = vector.load %arg2[%c0_6, %c1, %c0_7, %c0_8] : memref<1x16x2x128xf32, #tpu.memory_space<vmem>>, vector<1x1x2x128xf32>
    %8 = vector.shape_cast %7 : vector<1x1x2x128xf32> to vector<2x128xf32>
    %9 = arith.maximumf %6, %8 : vector<2x128xf32>
    %c0_9 = arith.constant 0 : index
    %c2 = arith.constant 2 : index
    %c0_10 = arith.constant 0 : index
    %c0_11 = arith.constant 0 : index
    %10 = vector.load %arg2[%c0_9, %c2, %c0_10, %c0_11] : memref<1x16x2x128xf32, #tpu.memory_space<vmem>>, vector<1x1x2x128xf32>
    %11 = vector.shape_cast %10 : vector<1x1x2x128xf32> to vector<2x128xf32>
    %12 = arith.maximumf %9, %11 : vector<2x128xf32>
    %c0_12 = arith.constant 0 : index
    %c3 = arith.constant 3 : index
    %c0_13 = arith.constant 0 : index
    %c0_14 = arith.constant 0 : index
    %13 = vector.load %arg2[%c0_12, %c3, %c0_13, %c0_14] : memref<1x16x2x128xf32, #tpu.memory_space<vmem>>, vector<1x1x2x128xf32>
    %14 = vector.shape_cast %13 : vector<1x1x2x128xf32> to vector<2x128xf32>
    %15 = arith.maximumf %12, %14 : vector<2x128xf32>
    %c0_15 = arith.constant 0 : index
    %c4 = arith.constant 4 : index
    %c0_16 = arith.constant 0 : index
    %c0_17 = arith.constant 0 : index
    %16 = vector.load %arg2[%c0_15, %c4, %c0_16, %c0_17] : memref<1x16x2x128xf32, #tpu.memory_space<vmem>>, vector<1x1x2x128xf32>
    %17 = vector.shape_cast %16 : vector<1x1x2x128xf32> to vector<2x128xf32>
    %18 = arith.maximumf %15, %17 : vector<2x128xf32>
    %c0_18 = arith.constant 0 : index
    %c5 = arith.constant 5 : index
    %c0_19 = arith.constant 0 : index
    %c0_20 = arith.constant 0 : index
    %19 = vector.load %arg2[%c0_18, %c5, %c0_19, %c0_20] : memref<1x16x2x128xf32, #tpu.memory_space<vmem>>, vector<1x1x2x128xf32>
    %20 = vector.shape_cast %19 : vector<1x1x2x128xf32> to vector<2x128xf32>
    %21 = arith.maximumf %18, %20 : vector<2x128xf32>
    %c0_21 = arith.constant 0 : index
    %c6 = arith.constant 6 : index
    %c0_22 = arith.constant 0 : index
    %c0_23 = arith.constant 0 : index
    %22 = vector.load %arg2[%c0_21, %c6, %c0_22, %c0_23] : memref<1x16x2x128xf32, #tpu.memory_space<vmem>>, vector<1x1x2x128xf32>
    %23 = vector.shape_cast %22 : vector<1x1x2x128xf32> to vector<2x128xf32>
    %24 = arith.maximumf %21, %23 : vector<2x128xf32>
    %c0_24 = arith.constant 0 : index
    %c7 = arith.constant 7 : index
    %c0_25 = arith.constant 0 : index
    %c0_26 = arith.constant 0 : index
    %25 = vector.load %arg2[%c0_24, %c7, %c0_25, %c0_26] : memref<1x16x2x128xf32, #tpu.memory_space<vmem>>, vector<1x1x2x128xf32>
    %26 = vector.shape_cast %25 : vector<1x1x2x128xf32> to vector<2x128xf32>
    %27 = arith.maximumf %24, %26 : vector<2x128xf32>
    %c0_27 = arith.constant 0 : index
    %c8 = arith.constant 8 : index
    %c0_28 = arith.constant 0 : index
    %c0_29 = arith.constant 0 : index
    %28 = vector.load %arg2[%c0_27, %c8, %c0_28, %c0_29] : memref<1x16x2x128xf32, #tpu.memory_space<vmem>>, vector<1x1x2x128xf32>
    %29 = vector.shape_cast %28 : vector<1x1x2x128xf32> to vector<2x128xf32>
    %30 = arith.maximumf %27, %29 : vector<2x128xf32>
    %c0_30 = arith.constant 0 : index
    %c9 = arith.constant 9 : index
    %c0_31 = arith.constant 0 : index
    %c0_32 = arith.constant 0 : index
    %31 = vector.load %arg2[%c0_30, %c9, %c0_31, %c0_32] : memref<1x16x2x128xf32, #tpu.memory_space<vmem>>, vector<1x1x2x128xf32>
    %32 = vector.shape_cast %31 : vector<1x1x2x128xf32> to vector<2x128xf32>
    %33 = arith.maximumf %30, %32 : vector<2x128xf32>
    %c0_33 = arith.constant 0 : index
    %c10 = arith.constant 10 : index
    %c0_34 = arith.constant 0 : index
    %c0_35 = arith.constant 0 : index
    %34 = vector.load %arg2[%c0_33, %c10, %c0_34, %c0_35] : memref<1x16x2x128xf32, #tpu.memory_space<vmem>>, vector<1x1x2x128xf32>
    %35 = vector.shape_cast %34 : vector<1x1x2x128xf32> to vector<2x128xf32>
    %36 = arith.maximumf %33, %35 : vector<2x128xf32>
    %c0_36 = arith.constant 0 : index
    %c11 = arith.constant 11 : index
    %c0_37 = arith.constant 0 : index
    %c0_38 = arith.constant 0 : index
    %37 = vector.load %arg2[%c0_36, %c11, %c0_37, %c0_38] : memref<1x16x2x128xf32, #tpu.memory_space<vmem>>, vector<1x1x2x128xf32>
    %38 = vector.shape_cast %37 : vector<1x1x2x128xf32> to vector<2x128xf32>
    %39 = arith.maximumf %36, %38 : vector<2x128xf32>
    %c0_39 = arith.constant 0 : index
    %c12 = arith.constant 12 : index
    %c0_40 = arith.constant 0 : index
    %c0_41 = arith.constant 0 : index
    %40 = vector.load %arg2[%c0_39, %c12, %c0_40, %c0_41] : memref<1x16x2x128xf32, #tpu.memory_space<vmem>>, vector<1x1x2x128xf32>
    %41 = vector.shape_cast %40 : vector<1x1x2x128xf32> to vector<2x128xf32>
    %42 = arith.maximumf %39, %41 : vector<2x128xf32>
    %c0_42 = arith.constant 0 : index
    %c13 = arith.constant 13 : index
    %c0_43 = arith.constant 0 : index
    %c0_44 = arith.constant 0 : index
    %43 = vector.load %arg2[%c0_42, %c13, %c0_43, %c0_44] : memref<1x16x2x128xf32, #tpu.memory_space<vmem>>, vector<1x1x2x128xf32>
    %44 = vector.shape_cast %43 : vector<1x1x2x128xf32> to vector<2x128xf32>
    %45 = arith.maximumf %42, %44 : vector<2x128xf32>
    %c0_45 = arith.constant 0 : index
    %c14 = arith.constant 14 : index
    %c0_46 = arith.constant 0 : index
    %c0_47 = arith.constant 0 : index
    %46 = vector.load %arg2[%c0_45, %c14, %c0_46, %c0_47] : memref<1x16x2x128xf32, #tpu.memory_space<vmem>>, vector<1x1x2x128xf32>
    %47 = vector.shape_cast %46 : vector<1x1x2x128xf32> to vector<2x128xf32>
    %48 = arith.maximumf %45, %47 : vector<2x128xf32>
    %c0_48 = arith.constant 0 : index
    %c15 = arith.constant 15 : index
    %c0_49 = arith.constant 0 : index
    %c0_50 = arith.constant 0 : index
    %49 = vector.load %arg2[%c0_48, %c15, %c0_49, %c0_50] : memref<1x16x2x128xf32, #tpu.memory_space<vmem>>, vector<1x1x2x128xf32>
    %50 = vector.shape_cast %49 : vector<1x1x2x128xf32> to vector<2x128xf32>
    %51 = arith.maximumf %48, %50 : vector<2x128xf32>
    %cst_51 = arith.constant 0.000000e+00 : f32
    %52 = vector.broadcast %cst_51 : f32 to vector<2x128xf32>
    %cst_52 = arith.constant 0.000000e+00 : f32
    %53 = vector.broadcast %cst_52 : f32 to vector<2x128xf32>
    %c0_53 = arith.constant 0 : index
    %c0_54 = arith.constant 0 : index
    %c0_55 = arith.constant 0 : index
    %c0_56 = arith.constant 0 : index
    %54 = vector.load %arg2[%c0_53, %c0_54, %c0_55, %c0_56] : memref<1x16x2x128xf32, #tpu.memory_space<vmem>>, vector<1x1x2x128xf32>
    %55 = vector.shape_cast %54 : vector<1x1x2x128xf32> to vector<2x128xf32>
    %56 = arith.subf %55, %51 : vector<2x128xf32>
    %57 = math.exp %56 : vector<2x128xf32>
    %58 = arith.addf %52, %57 : vector<2x128xf32>
    %c0_i32 = arith.constant 0 : i32
    %59 = vector.broadcast %c0_i32 : i32 to vector<2x128xi32>
    %60 = arith.cmpi eq, %4, %59 : vector<2x128xi32>
    %61 = arith.select %60, %56, %53 : vector<2x128xi1>, vector<2x128xf32>
    %c0_57 = arith.constant 0 : index
    %c1_58 = arith.constant 1 : index
    %c0_59 = arith.constant 0 : index
    %c0_60 = arith.constant 0 : index
    %62 = vector.load %arg2[%c0_57, %c1_58, %c0_59, %c0_60] : memref<1x16x2x128xf32, #tpu.memory_space<vmem>>, vector<1x1x2x128xf32>
    %63 = vector.shape_cast %62 : vector<1x1x2x128xf32> to vector<2x128xf32>
    %64 = arith.subf %63, %51 : vector<2x128xf32>
    %65 = math.exp %64 : vector<2x128xf32>
    %66 = arith.addf %58, %65 : vector<2x128xf32>
    %c1_i32 = arith.constant 1 : i32
    %67 = vector.broadcast %c1_i32 : i32 to vector<2x128xi32>
    %68 = arith.cmpi eq, %4, %67 : vector<2x128xi32>
    %69 = arith.select %68, %64, %61 : vector<2x128xi1>, vector<2x128xf32>
    %c0_61 = arith.constant 0 : index
    %c2_62 = arith.constant 2 : index
    %c0_63 = arith.constant 0 : index
    %c0_64 = arith.constant 0 : index
    %70 = vector.load %arg2[%c0_61, %c2_62, %c0_63, %c0_64] : memref<1x16x2x128xf32, #tpu.memory_space<vmem>>, vector<1x1x2x128xf32>
    %71 = vector.shape_cast %70 : vector<1x1x2x128xf32> to vector<2x128xf32>
    %72 = arith.subf %71, %51 : vector<2x128xf32>
    %73 = math.exp %72 : vector<2x128xf32>
    %74 = arith.addf %66, %73 : vector<2x128xf32>
    %c2_i32 = arith.constant 2 : i32
    %75 = vector.broadcast %c2_i32 : i32 to vector<2x128xi32>
    %76 = arith.cmpi eq, %4, %75 : vector<2x128xi32>
    %77 = arith.select %76, %72, %69 : vector<2x128xi1>, vector<2x128xf32>
    %c0_65 = arith.constant 0 : index
    %c3_66 = arith.constant 3 : index
    %c0_67 = arith.constant 0 : index
    %c0_68 = arith.constant 0 : index
    %78 = vector.load %arg2[%c0_65, %c3_66, %c0_67, %c0_68] : memref<1x16x2x128xf32, #tpu.memory_space<vmem>>, vector<1x1x2x128xf32>
    %79 = vector.shape_cast %78 : vector<1x1x2x128xf32> to vector<2x128xf32>
    %80 = arith.subf %79, %51 : vector<2x128xf32>
    %81 = math.exp %80 : vector<2x128xf32>
    %82 = arith.addf %74, %81 : vector<2x128xf32>
    %c3_i32 = arith.constant 3 : i32
    %83 = vector.broadcast %c3_i32 : i32 to vector<2x128xi32>
    %84 = arith.cmpi eq, %4, %83 : vector<2x128xi32>
    %85 = arith.select %84, %80, %77 : vector<2x128xi1>, vector<2x128xf32>
    %c0_69 = arith.constant 0 : index
    %c4_70 = arith.constant 4 : index
    %c0_71 = arith.constant 0 : index
    %c0_72 = arith.constant 0 : index
    %86 = vector.load %arg2[%c0_69, %c4_70, %c0_71, %c0_72] : memref<1x16x2x128xf32, #tpu.memory_space<vmem>>, vector<1x1x2x128xf32>
    %87 = vector.shape_cast %86 : vector<1x1x2x128xf32> to vector<2x128xf32>
    %88 = arith.subf %87, %51 : vector<2x128xf32>
    %89 = math.exp %88 : vector<2x128xf32>
    %90 = arith.addf %82, %89 : vector<2x128xf32>
    %c4_i32 = arith.constant 4 : i32
    %91 = vector.broadcast %c4_i32 : i32 to vector<2x128xi32>
    %92 = arith.cmpi eq, %4, %91 : vector<2x128xi32>
    %93 = arith.select %92, %88, %85 : vector<2x128xi1>, vector<2x128xf32>
    %c0_73 = arith.constant 0 : index
    %c5_74 = arith.constant 5 : index
    %c0_75 = arith.constant 0 : index
    %c0_76 = arith.constant 0 : index
    %94 = vector.load %arg2[%c0_73, %c5_74, %c0_75, %c0_76] : memref<1x16x2x128xf32, #tpu.memory_space<vmem>>, vector<1x1x2x128xf32>
    %95 = vector.shape_cast %94 : vector<1x1x2x128xf32> to vector<2x128xf32>
    %96 = arith.subf %95, %51 : vector<2x128xf32>
    %97 = math.exp %96 : vector<2x128xf32>
    %98 = arith.addf %90, %97 : vector<2x128xf32>
    %c5_i32 = arith.constant 5 : i32
    %99 = vector.broadcast %c5_i32 : i32 to vector<2x128xi32>
    %100 = arith.cmpi eq, %4, %99 : vector<2x128xi32>
    %101 = arith.select %100, %96, %93 : vector<2x128xi1>, vector<2x128xf32>
    %c0_77 = arith.constant 0 : index
    %c6_78 = arith.constant 6 : index
    %c0_79 = arith.constant 0 : index
    %c0_80 = arith.constant 0 : index
    %102 = vector.load %arg2[%c0_77, %c6_78, %c0_79, %c0_80] : memref<1x16x2x128xf32, #tpu.memory_space<vmem>>, vector<1x1x2x128xf32>
    %103 = vector.shape_cast %102 : vector<1x1x2x128xf32> to vector<2x128xf32>
    %104 = arith.subf %103, %51 : vector<2x128xf32>
    %105 = math.exp %104 : vector<2x128xf32>
    %106 = arith.addf %98, %105 : vector<2x128xf32>
    %c6_i32 = arith.constant 6 : i32
    %107 = vector.broadcast %c6_i32 : i32 to vector<2x128xi32>
    %108 = arith.cmpi eq, %4, %107 : vector<2x128xi32>
    %109 = arith.select %108, %104, %101 : vector<2x128xi1>, vector<2x128xf32>
    %c0_81 = arith.constant 0 : index
    %c7_82 = arith.constant 7 : index
    %c0_83 = arith.constant 0 : index
    %c0_84 = arith.constant 0 : index
    %110 = vector.load %arg2[%c0_81, %c7_82, %c0_83, %c0_84] : memref<1x16x2x128xf32, #tpu.memory_space<vmem>>, vector<1x1x2x128xf32>
    %111 = vector.shape_cast %110 : vector<1x1x2x128xf32> to vector<2x128xf32>
    %112 = arith.subf %111, %51 : vector<2x128xf32>
    %113 = math.exp %112 : vector<2x128xf32>
    %114 = arith.addf %106, %113 : vector<2x128xf32>
    %c7_i32 = arith.constant 7 : i32
    %115 = vector.broadcast %c7_i32 : i32 to vector<2x128xi32>
    %116 = arith.cmpi eq, %4, %115 : vector<2x128xi32>
    %117 = arith.select %116, %112, %109 : vector<2x128xi1>, vector<2x128xf32>
    %c0_85 = arith.constant 0 : index
    %c8_86 = arith.constant 8 : index
    %c0_87 = arith.constant 0 : index
    %c0_88 = arith.constant 0 : index
    %118 = vector.load %arg2[%c0_85, %c8_86, %c0_87, %c0_88] : memref<1x16x2x128xf32, #tpu.memory_space<vmem>>, vector<1x1x2x128xf32>
    %119 = vector.shape_cast %118 : vector<1x1x2x128xf32> to vector<2x128xf32>
    %120 = arith.subf %119, %51 : vector<2x128xf32>
    %121 = math.exp %120 : vector<2x128xf32>
    %122 = arith.addf %114, %121 : vector<2x128xf32>
    %c8_i32 = arith.constant 8 : i32
    %123 = vector.broadcast %c8_i32 : i32 to vector<2x128xi32>
    %124 = arith.cmpi eq, %4, %123 : vector<2x128xi32>
    %125 = arith.select %124, %120, %117 : vector<2x128xi1>, vector<2x128xf32>
    %c0_89 = arith.constant 0 : index
    %c9_90 = arith.constant 9 : index
    %c0_91 = arith.constant 0 : index
    %c0_92 = arith.constant 0 : index
    %126 = vector.load %arg2[%c0_89, %c9_90, %c0_91, %c0_92] : memref<1x16x2x128xf32, #tpu.memory_space<vmem>>, vector<1x1x2x128xf32>
    %127 = vector.shape_cast %126 : vector<1x1x2x128xf32> to vector<2x128xf32>
    %128 = arith.subf %127, %51 : vector<2x128xf32>
    %129 = math.exp %128 : vector<2x128xf32>
    %130 = arith.addf %122, %129 : vector<2x128xf32>
    %c9_i32 = arith.constant 9 : i32
    %131 = vector.broadcast %c9_i32 : i32 to vector<2x128xi32>
    %132 = arith.cmpi eq, %4, %131 : vector<2x128xi32>
    %133 = arith.select %132, %128, %125 : vector<2x128xi1>, vector<2x128xf32>
    %c0_93 = arith.constant 0 : index
    %c10_94 = arith.constant 10 : index
    %c0_95 = arith.constant 0 : index
    %c0_96 = arith.constant 0 : index
    %134 = vector.load %arg2[%c0_93, %c10_94, %c0_95, %c0_96] : memref<1x16x2x128xf32, #tpu.memory_space<vmem>>, vector<1x1x2x128xf32>
    %135 = vector.shape_cast %134 : vector<1x1x2x128xf32> to vector<2x128xf32>
    %136 = arith.subf %135, %51 : vector<2x128xf32>
    %137 = math.exp %136 : vector<2x128xf32>
    %138 = arith.addf %130, %137 : vector<2x128xf32>
    %c10_i32 = arith.constant 10 : i32
    %139 = vector.broadcast %c10_i32 : i32 to vector<2x128xi32>
    %140 = arith.cmpi eq, %4, %139 : vector<2x128xi32>
    %141 = arith.select %140, %136, %133 : vector<2x128xi1>, vector<2x128xf32>
    %c0_97 = arith.constant 0 : index
    %c11_98 = arith.constant 11 : index
    %c0_99 = arith.constant 0 : index
    %c0_100 = arith.constant 0 : index
    %142 = vector.load %arg2[%c0_97, %c11_98, %c0_99, %c0_100] : memref<1x16x2x128xf32, #tpu.memory_space<vmem>>, vector<1x1x2x128xf32>
    %143 = vector.shape_cast %142 : vector<1x1x2x128xf32> to vector<2x128xf32>
    %144 = arith.subf %143, %51 : vector<2x128xf32>
    %145 = math.exp %144 : vector<2x128xf32>
    %146 = arith.addf %138, %145 : vector<2x128xf32>
    %c11_i32 = arith.constant 11 : i32
    %147 = vector.broadcast %c11_i32 : i32 to vector<2x128xi32>
    %148 = arith.cmpi eq, %4, %147 : vector<2x128xi32>
    %149 = arith.select %148, %144, %141 : vector<2x128xi1>, vector<2x128xf32>
    %c0_101 = arith.constant 0 : index
    %c12_102 = arith.constant 12 : index
    %c0_103 = arith.constant 0 : index
    %c0_104 = arith.constant 0 : index
    %150 = vector.load %arg2[%c0_101, %c12_102, %c0_103, %c0_104] : memref<1x16x2x128xf32, #tpu.memory_space<vmem>>, vector<1x1x2x128xf32>
    %151 = vector.shape_cast %150 : vector<1x1x2x128xf32> to vector<2x128xf32>
    %152 = arith.subf %151, %51 : vector<2x128xf32>
    %153 = math.exp %152 : vector<2x128xf32>
    %154 = arith.addf %146, %153 : vector<2x128xf32>
    %c12_i32 = arith.constant 12 : i32
    %155 = vector.broadcast %c12_i32 : i32 to vector<2x128xi32>
    %156 = arith.cmpi eq, %4, %155 : vector<2x128xi32>
    %157 = arith.select %156, %152, %149 : vector<2x128xi1>, vector<2x128xf32>
    %c0_105 = arith.constant 0 : index
    %c13_106 = arith.constant 13 : index
    %c0_107 = arith.constant 0 : index
    %c0_108 = arith.constant 0 : index
    %158 = vector.load %arg2[%c0_105, %c13_106, %c0_107, %c0_108] : memref<1x16x2x128xf32, #tpu.memory_space<vmem>>, vector<1x1x2x128xf32>
    %159 = vector.shape_cast %158 : vector<1x1x2x128xf32> to vector<2x128xf32>
    %160 = arith.subf %159, %51 : vector<2x128xf32>
    %161 = math.exp %160 : vector<2x128xf32>
    %162 = arith.addf %154, %161 : vector<2x128xf32>
    %c13_i32 = arith.constant 13 : i32
    %163 = vector.broadcast %c13_i32 : i32 to vector<2x128xi32>
    %164 = arith.cmpi eq, %4, %163 : vector<2x128xi32>
    %165 = arith.select %164, %160, %157 : vector<2x128xi1>, vector<2x128xf32>
    %c0_109 = arith.constant 0 : index
    %c14_110 = arith.constant 14 : index
    %c0_111 = arith.constant 0 : index
    %c0_112 = arith.constant 0 : index
    %166 = vector.load %arg2[%c0_109, %c14_110, %c0_111, %c0_112] : memref<1x16x2x128xf32, #tpu.memory_space<vmem>>, vector<1x1x2x128xf32>
    %167 = vector.shape_cast %166 : vector<1x1x2x128xf32> to vector<2x128xf32>
    %168 = arith.subf %167, %51 : vector<2x128xf32>
    %169 = math.exp %168 : vector<2x128xf32>
    %170 = arith.addf %162, %169 : vector<2x128xf32>
    %c14_i32 = arith.constant 14 : i32
    %171 = vector.broadcast %c14_i32 : i32 to vector<2x128xi32>
    %172 = arith.cmpi eq, %4, %171 : vector<2x128xi32>
    %173 = arith.select %172, %168, %165 : vector<2x128xi1>, vector<2x128xf32>
    %c0_113 = arith.constant 0 : index
    %c15_114 = arith.constant 15 : index
    %c0_115 = arith.constant 0 : index
    %c0_116 = arith.constant 0 : index
    %174 = vector.load %arg2[%c0_113, %c15_114, %c0_115, %c0_116] : memref<1x16x2x128xf32, #tpu.memory_space<vmem>>, vector<1x1x2x128xf32>
    %175 = vector.shape_cast %174 : vector<1x1x2x128xf32> to vector<2x128xf32>
    %176 = arith.subf %175, %51 : vector<2x128xf32>
    %177 = math.exp %176 : vector<2x128xf32>
    %178 = arith.addf %170, %177 : vector<2x128xf32>
    %c15_i32 = arith.constant 15 : i32
    %179 = vector.broadcast %c15_i32 : i32 to vector<2x128xi32>
    %180 = arith.cmpi eq, %4, %179 : vector<2x128xi32>
    %181 = arith.select %180, %176, %173 : vector<2x128xi1>, vector<2x128xf32>
    %182 = math.log %178 : vector<2x128xf32>
    %183 = arith.subf %182, %181 : vector<2x128xf32>
    %cst_117 = arith.constant dense<0.000000e+00> : vector<2xf32>
    %184 = vector.multi_reduction <add>, %183, %cst_117 [1] : vector<2x128xf32> to vector<2xf32>
    %185 = vector.shape_cast %184 : vector<2xf32> to vector<2x1xf32>
    %c0_118 = arith.constant 0 : index
    %c0_119 = arith.constant 0 : index
    %c0_120 = arith.constant 0 : index
    %186 = vector.load %arg4[%c0_118, %c0_119, %c0_120] : memref<1x2x1xf32, #tpu.memory_space<vmem>>, vector<1x2x1xf32>
    %187 = vector.shape_cast %186 : vector<1x2x1xf32> to vector<2x1xf32>
    %188 = vector.shape_cast %185 : vector<2x1xf32> to vector<1x2x1xf32>
    tpu.vector_store %arg4[%c0_118, %c0_119, %c0_120], %188 {strides = array<i32>} : memref<1x2x1xf32, #tpu.memory_space<vmem>>, vector<1x2x1xf32>,
    return
  }
  func.func @transform_0(%arg0: i32, %arg1: i32) -> (i32, i32, i32, i32) {
    %c0_i32 = arith.constant 0 : i32
    %c0_i32_0 = arith.constant 0 : i32
    %c0_i32_1 = arith.constant 0 : i32
    return %arg0, %c0_i32, %arg1, %c0_i32_0 : i32, i32, i32, i32
  }
  func.func @transform_1(%arg0: i32, %arg1: i32) -> (i32, i32, i32) {
    %c0_i32 = arith.constant 0 : i32
    %c0_i32_0 = arith.constant 0 : i32
    return %arg0, %arg1, %c0_i32 : i32, i32, i32
  }
  func.func @transform_2(%arg0: i32, %arg1: i32) -> (i32, i32, i32) {
    %c0_i32 = arith.constant 0 : i32
    %c0_i32_0 = arith.constant 0 : i32
    return %arg0, %arg1, %c0_i32 : i32, i32, i32
  }
}

</mosaic_0001>

<llo_original>
// kernel: tpu_custom_call.1
$region0: #{tpu_custom_call.1}
  #allocation0 [shape = 'u32[]', space=smem, size = 0x4, offset = 0x4, fixed_abs, tag = 'smem constant byte address 0x4 - core index']
  #allocation1 [shape = 'u32[144,128]{1,0:T(1,128)}', space=vmem, size = 0x12000, scoped, tag = 'internal scratch']
  %s0 = inlined_call_operand.hbm [shape: f32[2,16,2,128], index: 0, kind: input, shape index: {}]
  %s1 = inlined_call_operand.hbm [shape: f32[2,2,128], index: 1, kind: input, shape index: {}]
  %s2 = inlined_call_operand.vmem [shape: f32[2,2,1], index: 2, kind: output, shape index: {}]
  %s3 = sld [smem:[#allocation0]]
  $region49: #{tpu_custom_call.1} parent=0
    _
  %s5 = ssub.s32 1, %s3
  %s6 = scalar_select 0, %s5, %s3
  $region1: #{tpu_custom_call.1} parent=0
    #allocation2 [shape = 'u8[32768]{0}', space=vmem, size = 0x8000, scoped, tag = 'input window, operand 0']
    #allocation3 [shape = 's32[2]{0}', space=sflag, size = 0x8, scoped, tag = 'scoped memory for tpu_custom_call.1']
    #allocation4 [shape = 'u8[2048]{0}', space=vmem, size = 0x800, scoped, tag = 'input window, operand 1']
    #allocation5 [shape = 's32[2]{0}', space=sflag, size = 0x8, scoped, tag = 'scoped memory for tpu_custom_call.1']
    %7 = vsyncpa [#allocation3], 0
    %s8 = scalar_lea.sflag [#allocation3], 1
    %9 = vsyncpa %s8, 0
    %10 = vsyncpa [#allocation5], 0
    %s11 = scalar_lea.sflag [#allocation5], 1
    %12 = vsyncpa %s11, 0
    loop: start=0, step=1, limit=4
    $region2: #{tpu_custom_call.1} parent=1 // loop_pre_header
      _
    $region3: #{tpu_custom_call.1} parent=1 // loop_header
      %s14 = sphi 0, %s18
      %p15 = scmp.ge.s32.totalorder %s14, 4
      %s21 = sphi 0, %s33
      %s22 = sphi 0, %s29
      %s23 = sphi 0, %s21
      %s24 = sphi 0, %s22
      %s25 = sphi 0, %s23
      %s26 = sphi 0, %s24
      %s38 = sphi 0, %s40
      %s41 = sphi 0, %s38
      %s42 = sphi 0, %s41
      %s58 = sphi 0, %s42
      %s66 = sphi 0, %s68
      %s69 = sphi 0, %s66
      %s70 = sphi 0, %s69
      %s86 = sphi 0, %s70
      %s94 = sphi 0, %s96
      %s97 = sphi 0, %s94
      %s98 = sphi 0, %s97
      %s114 = sphi 0, %s98
    $region4: #{tpu_custom_call.1} parent=1 // loop_header_branch
      %17 = sbr.rel (%p15) target = $region8
    $region5: #{tpu_custom_call.1} parent=1 // loop_body
      %s19 = ssub.s32 %s14, 1
      %s20 = ssub.s32 %s14, 2
      %s27 = sadd.s32 1, %s22
      %p28 = scmp.ge.s32.totalorder %s27, 1
      %s29 = scalar_select %p28, 0, %s27
      %s30 = sadd.s32 1, %s21
      %s31 = scalar_select %p28, %s30, %s21
      %p32 = scmp.ge.s32.totalorder %s31, 2
      %s33 = scalar_select %p32, 0, %s31
      %s34 = ssub.s32 %s21, %s33
      %s35 = ssub.s32 %s22, %s29
      %s36 = sor.u32 %s34, %s35
      %p37 = scmp.eq.s32.totalorder %s36, 0
      %s39 = sadd.s32 %s38, 1
      %s40 = scalar_select %p37, %s38, %s39
      %p43 = pneg %p37
      %p44 = scmp.eq.s32.totalorder %s14, 1
      %p45 = por %p43, %p44
      %p46 = scmp.ne.s32.totalorder %s38, %s41
      %p47 = scmp.eq.s32.totalorder %s14, 0
      %p48 = por %p46, %p47
      %p49 = scmp.ne.s32.totalorder %s38, %s41
      %p50 = scmp.eq.s32.totalorder %s19, 1
      %p51 = por %p49, %p50
      %p52 = scmp.ne.s32.totalorder %s41, %s42
      %p53 = scmp.eq.s32.totalorder %s19, 0
      %p54 = por %p52, %p53
      %p55 = scmp.ne.s32.totalorder %s41, %s42
      %p56 = scmp.eq.s32.totalorder %s20, 1
      %p57 = por %p55, %p56
      %p59 = scmp.ne.s32.totalorder %s42, %s58
      %p60 = scmp.eq.s32.totalorder %s20, 0
      %p61 = por %p59, %p60
      %s62 = ssub.s32 %s21, %s33
      %s63 = ssub.s32 %s22, %s29
      %s64 = sor.u32 %s62, %s63
      %p65 = scmp.eq.s32.totalorder %s64, 0
      %s67 = sadd.s32 %s66, 1
      %s68 = scalar_select %p65, %s66, %s67
      %p71 = pneg %p65
      %p72 = scmp.eq.s32.totalorder %s14, 1
      %p73 = por %p71, %p72
      %p74 = scmp.ne.s32.totalorder %s66, %s69
      %p75 = scmp.eq.s32.totalorder %s14, 0
      %p76 = por %p74, %p75
      %p77 = scmp.ne.s32.totalorder %s66, %s69
      %p78 = scmp.eq.s32.totalorder %s19, 1
      %p79 = por %p77, %p78
      %p80 = scmp.ne.s32.totalorder %s69, %s70
      %p81 = scmp.eq.s32.totalorder %s19, 0
      %p82 = por %p80, %p81
      %p83 = scmp.ne.s32.totalorder %s69, %s70
      %p84 = scmp.eq.s32.totalorder %s20, 1
      %p85 = por %p83, %p84
      %p87 = scmp.ne.s32.totalorder %s70, %s86
      %p88 = scmp.eq.s32.totalorder %s20, 0
      %p89 = por %p87, %p88
      %s90 = ssub.s32 %s21, %s33
      %s91 = ssub.s32 %s22, %s29
      %s92 = sor.u32 %s90, %s91
      %p93 = scmp.eq.s32.totalorder %s92, 0
      %s95 = sadd.s32 %s94, 1
      %s96 = scalar_select %p93, %s94, %s95
      %p99 = pneg %p93
      %p100 = scmp.eq.s32.totalorder %s14, 1
      %p101 = por %p99, %p100
      %p102 = scmp.ne.s32.totalorder %s94, %s97
      %p103 = scmp.eq.s32.totalorder %s14, 0
      %p104 = por %p102, %p103
      %p105 = scmp.ne.s32.totalorder %s94, %s97
      %p106 = scmp.eq.s32.totalorder %s19, 1
      %p107 = por %p105, %p106
      %p108 = scmp.ne.s32.totalorder %s97, %s98
      %p109 = scmp.eq.s32.totalorder %s19, 0
      %p110 = por %p108, %p109
      %p111 = scmp.ne.s32.totalorder %s97, %s98
      %p112 = scmp.eq.s32.totalorder %s20, 1
      %p113 = por %p111, %p112
      %p115 = scmp.ne.s32.totalorder %s98, %s114
      %p116 = scmp.eq.s32.totalorder %s20, 0
      %p117 = por %p115, %p116
      %p118 = scmp.le.s32.totalorder 1, %s14
      %p119 = scmp.lt.s32.totalorder %s14, 3
      %p120 = pnand %p118, %p119
      %p121 = pneg %p120
      // Predicated region
      $region9: #{tpu_custom_call.1} parent=5 // pred_check
        _
      $region10: #{tpu_custom_call.1} parent=5 // pred_check_branch
        %123 = sbr.rel (%p120) target = $region12
      $region11: #{tpu_custom_call.1} parent=5 // pred_region
        %s124 = ssub.s32 %s14, 1
      $region12: #{tpu_custom_call.1} parent=5 // pred_fallthru
        _
      %p125 = scmp.lt.s32.totalorder %s14, 2
      // Predicated region
      $region13: #{tpu_custom_call.1} parent=5 // pred_check
        %p126 = pneg %p125
      $region14: #{tpu_custom_call.1} parent=5 // pred_check_branch
        %128 = sbr.rel (%p126) target = $region16
      $region15: #{tpu_custom_call.1} parent=5 // pred_region
        // Predicated region
        $region17: #{tpu_custom_call.1} parent=15 // pred_check
          %p129 = pneg %p48
        $region18: #{tpu_custom_call.1} parent=15 // pred_check_branch
          %131 = sbr.rel (%p129) target = $region20
        $region19: #{tpu_custom_call.1} parent=15 // pred_region
          %s132 = sand.u32 %s38, 1
          %s133 = scalar_lea.sflag [#allocation3], %s132
          %s134 = sand.u32 %s38, 1
          %s135 = smul.addr %s134, 32
          %s136 = scalar_lea.vmem [#allocation2], %s135
          %s138 = ssub.s32 512, 512
          %139 = vsyncadd %s133, %s138
          %s140 = smul.addr %s21, 16
          %s141 = sadd.s32 %s22, %s140
          %s142 = smul.addr %s141, 32
          %s143 = scalar_lea.hbm %s0, %s142
          %s144 = sshll.u32 %s136, 4
          %s145 = int_to_ptr.vmem [resolvable:$true] %s144
          %150 = dma.hbm_to_vmem [thread:$0]  %s143, 512, %s145, %s133, 32, 32, 2
        $region20: #{tpu_custom_call.1} parent=15 // pred_fallthru
          _
        // Predicated region
        $region21: #{tpu_custom_call.1} parent=15 // pred_check
          %p151 = pneg %p76
        $region22: #{tpu_custom_call.1} parent=15 // pred_check_branch
          %153 = sbr.rel (%p151) target = $region24
        $region23: #{tpu_custom_call.1} parent=15 // pred_region
          %s154 = sand.u32 %s66, 1
          %s155 = scalar_lea.sflag [#allocation5], %s154
          %s156 = sand.u32 %s66, 1
          %s157 = smul.addr %s156, 2
          %s158 = scalar_lea.vmem [#allocation4], %s157
          %s160 = ssub.s32 32, 32
          %161 = vsyncadd %s155, %s160
          %s162 = sadd.s32 %s22, %s21
          %s163 = smul.addr %s162, 32
          %s164 = scalar_lea.hbm %s1, %s163
          %s166 = sshll.u32 %s158, 4
          %s167 = int_to_ptr.vmem [resolvable:$true] %s166
          %169 = dma.hbm_to_vmem [thread:$0]  %s164, 32, %s167, %s155
        $region24: #{tpu_custom_call.1} parent=15 // pred_fallthru
          _
      $region16: #{tpu_custom_call.1} parent=5 // pred_fallthru
        _
      %p170 = scmp.le.s32.totalorder 1, %s14
      %p171 = scmp.lt.s32.totalorder %s14, 3
      %p172 = pnand %p170, %p171
      %p173 = pneg %p172
      // Predicated region
      $region25: #{tpu_custom_call.1} parent=5 // pred_check
        _
      $region26: #{tpu_custom_call.1} parent=5 // pred_check_branch
        %175 = sbr.rel (%p172) target = $region28
      $region27: #{tpu_custom_call.1} parent=5 // pred_region
        %s176 = ssub.s32 %s14, 1
        %s177 = sand.u32 %s41, 1
        %s178 = scalar_lea.sflag [#allocation3], %s177
        %s179 = sand.u32 %s41, 1
        %s180 = smul.addr %s179, 32
        %s181 = scalar_lea.vmem [#allocation2], %s180
        // Predicated region
        $region29: #{tpu_custom_call.1} parent=27 // pred_check
          %p182 = pneg %p54
        $region30: #{tpu_custom_call.1} parent=27 // pred_check_branch
          %184 = sbr.rel (%p182) target = $region32
        $region31: #{tpu_custom_call.1} parent=27 // pred_region
          %185 = dma.done %s178, 512
        $region32: #{tpu_custom_call.1} parent=27 // pred_fallthru
          _
        %s186 = sand.u32 %s69, 1
        %s187 = scalar_lea.sflag [#allocation5], %s186
        %s188 = sand.u32 %s69, 1
        %s189 = smul.addr %s188, 2
        %s190 = scalar_lea.vmem [#allocation4], %s189
        // Predicated region
        $region33: #{tpu_custom_call.1} parent=27 // pred_check
          %p191 = pneg %p82
        $region34: #{tpu_custom_call.1} parent=27 // pred_check_branch
          %193 = sbr.rel (%p191) target = $region36
        $region35: #{tpu_custom_call.1} parent=27 // pred_region
          %194 = dma.done %s187, 32
        $region36: #{tpu_custom_call.1} parent=27 // pred_fallthru
          _
        %s195 = sand.u32 %s41, 1
        %s196 = scalar_lea.sflag [#allocation3], %s195
        %s197 = sand.u32 %s41, 1
        %s198 = smul.addr %s197, 32
        %s199 = scalar_lea.vmem [#allocation2], %s198
        %p200 = pneg %p54
        %p201 = pneg %p51
        %s202 = sand.u32 %s69, 1
        %s203 = scalar_lea.sflag [#allocation5], %s202
        %s204 = sand.u32 %s69, 1
        %s205 = smul.addr %s204, 2
        %s206 = scalar_lea.vmem [#allocation4], %s205
        %p207 = pneg %p82
        %p208 = pneg %p79
        %p209 = pneg %p110
        %p210 = pneg %p107
        %p211 = scmp.lt.s32.totalorder %s23, 1
        %s212 = scalar_select %p211, %s23, 1
        %p213 = scmp.lt.s32.totalorder %s24, 0
        %s214 = scalar_select %p213, %s24, 0
        %s215 = sadd.s32 %s214, %s212
        %s216 = smul.addr %s215, 2
        %s217 = scalar_lea.vmem %s2, %s216
        %p218 = scmp.lt.s32.totalorder %s23, 1
        %s219 = scalar_select %p218, %s23, 1
        %p220 = scmp.lt.s32.totalorder %s24, 0
        %s221 = scalar_select %p220, %s24, 0
        %s222 = sadd.s32 %s221, %s219
        %s223 = smul.addr %s222, 2
        %s224 = scalar_lea.vmem %s2, %s223
        %v225 = vld [vmem:[%s190] sm:$0x3]
        %v226 = vmul.f32 %v225, 4.0
        %v227 = vcvt.f32.s32.to.zero.pseudo %v226
        %v228 = vld [vmem:[%s181] sm:$0x3]
        %s229 = scalar_lea.vmem %s181, 2 [#allocation2]
        %v230 = vld [vmem:[%s229] sm:$0x3]
        %v231 = vmax.f32 %v228, %v230
        %s232 = scalar_lea.vmem %s181, 4 [#allocation2]
        %v233 = vld [vmem:[%s232] sm:$0x3]
        %v234 = vmax.f32 %v231, %v233
        %s235 = scalar_lea.vmem %s181, 6 [#allocation2]
        %v236 = vld [vmem:[%s235] sm:$0x3]
        %v237 = vmax.f32 %v234, %v236
        %s238 = scalar_lea.vmem %s181, 8 [#allocation2]
        %v239 = vld [vmem:[%s238] sm:$0x3]
        %v240 = vmax.f32 %v237, %v239
        %s241 = scalar_lea.vmem %s181, 10 [#allocation2]
        %v242 = vld [vmem:[%s241] sm:$0x3]
        %v243 = vmax.f32 %v240, %v242
        %s244 = scalar_lea.vmem %s181, 12 [#allocation2]
        %v245 = vld [vmem:[%s244] sm:$0x3]
        %v246 = vmax.f32 %v243, %v245
        %s247 = scalar_lea.vmem %s181, 14 [#allocation2]
        %v248 = vld [vmem:[%s247] sm:$0x3]
        %v249 = vmax.f32 %v246, %v248
        %s250 = scalar_lea.vmem %s181, 16 [#allocation2]
        %v251 = vld [vmem:[%s250] sm:$0x3]
        %v252 = vmax.f32 %v249, %v251
        %s253 = scalar_lea.vmem %s181, 18 [#allocation2]
        %v254 = vld [vmem:[%s253] sm:$0x3]
        %v255 = vmax.f32 %v252, %v254
        %s256 = scalar_lea.vmem %s181, 20 [#allocation2]
        %v257 = vld [vmem:[%s256] sm:$0x3]
        %v258 = vmax.f32 %v255, %v257
        %s259 = scalar_lea.vmem %s181, 22 [#allocation2]
        %v260 = vld [vmem:[%s259] sm:$0x3]
        %v261 = vmax.f32 %v258, %v260
        %s262 = scalar_lea.vmem %s181, 24 [#allocation2]
        %v263 = vld [vmem:[%s262] sm:$0x3]
        %v264 = vmax.f32 %v261, %v263
        %s265 = scalar_lea.vmem %s181, 26 [#allocation2]
        %v266 = vld [vmem:[%s265] sm:$0x3]
        %v267 = vmax.f32 %v264, %v266
        %s268 = scalar_lea.vmem %s181, 28 [#allocation2]
        %v269 = vld [vmem:[%s268] sm:$0x3]
        %v270 = vmax.f32 %v267, %v269
        %s271 = scalar_lea.vmem %s181, 30 [#allocation2]
        %v272 = vld [vmem:[%s271] sm:$0x3]
        %v273 = vmax.f32 %v270, %v272
        %v274 = vsub.f32 %v228, %v273
        %v275 = vmul.f32 %v274, 1.442695
        %v276 = vpow.pop %v275
        %v277 = vadd.f32 %v276, 0.0
        %vm278 = vcmp.eq.s32.totalorder %v227, 0
        %v279 = vsel %vm278, %v274, 0.0
        %v280 = vsub.f32 %v230, %v273
        %v281 = vmul.f32 %v280, 1.442695
        %v282 = vpow.pop %v281
        %v283 = vadd.f32 %v277, %v282
        %vm284 = vcmp.eq.s32.totalorder %v227, 1
        %v285 = vsel %vm284, %v280, %v279
        %v286 = vsub.f32 %v233, %v273
        %v287 = vmul.f32 %v286, 1.442695
        %v288 = vpow.pop %v287
        %v289 = vadd.f32 %v283, %v288
        %vm290 = vcmp.eq.s32.totalorder %v227, 2
        %v291 = vsel %vm290, %v286, %v285
        %v292 = vsub.f32 %v236, %v273
        %v293 = vmul.f32 %v292, 1.442695
        %v294 = vpow.pop %v293
        %v295 = vadd.f32 %v289, %v294
        %vm296 = vcmp.eq.s32.totalorder %v227, 3
        %v297 = vsel %vm296, %v292, %v291
        %v298 = vsub.f32 %v239, %v273
        %v299 = vmul.f32 %v298, 1.442695
        %v300 = vpow.pop %v299
        %v301 = vadd.f32 %v295, %v300
        %vm302 = vcmp.eq.s32.totalorder %v227, 4
        %v303 = vsel %vm302, %v298, %v297
        %v304 = vsub.f32 %v242, %v273
        %v305 = vmul.f32 %v304, 1.442695
        %v306 = vpow.pop %v305
        %v307 = vadd.f32 %v301, %v306
        %vm308 = vcmp.eq.s32.totalorder %v227, 5
        %v309 = vsel %vm308, %v304, %v303
        %v310 = vsub.f32 %v245, %v273
        %v311 = vmul.f32 %v310, 1.442695
        %v312 = vpow.pop %v311
        %v313 = vadd.f32 %v307, %v312
        %vm314 = vcmp.eq.s32.totalorder %v227, 6
        %v315 = vsel %vm314, %v310, %v309
        %v316 = vsub.f32 %v248, %v273
        %v317 = vmul.f32 %v316, 1.442695
        %v318 = vpow.pop %v317
        %v319 = vadd.f32 %v313, %v318
        %vm320 = vcmp.eq.s32.totalorder %v227, 7
        %v321 = vsel %vm320, %v316, %v315
        %v322 = vsub.f32 %v251, %v273
        %v323 = vmul.f32 %v322, 1.442695
        %v324 = vpow.pop %v323
        %v325 = vadd.f32 %v319, %v324
        %vm326 = vcmp.eq.s32.totalorder %v227, 8
        %v327 = vsel %vm326, %v322, %v321
        %v328 = vsub.f32 %v254, %v273
        %v329 = vmul.f32 %v328, 1.442695
        %v330 = vpow.pop %v329
        %v331 = vadd.f32 %v325, %v330
        %vm332 = vcmp.eq.s32.totalorder %v227, 9
        %v333 = vsel %vm332, %v328, %v327
        %v334 = vsub.f32 %v257, %v273
        %v335 = vmul.f32 %v334, 1.442695
        %v336 = vpow.pop %v335
        %v337 = vadd.f32 %v331, %v336
        %vm338 = vcmp.eq.s32.totalorder %v227, 10
        %v339 = vsel %vm338, %v334, %v333
        %v340 = vsub.f32 %v260, %v273
        %v341 = vmul.f32 %v340, 1.442695
        %v342 = vpow.pop %v341
        %v343 = vadd.f32 %v337, %v342
        %vm344 = vcmp.eq.s32.totalorder %v227, 11
        %v345 = vsel %vm344, %v340, %v339
        %v346 = vsub.f32 %v263, %v273
        %v347 = vmul.f32 %v346, 1.442695
        %v348 = vpow.pop %v347
        %v349 = vadd.f32 %v343, %v348
        %vm350 = vcmp.eq.s32.totalorder %v227, 12
        %v351 = vsel %vm350, %v346, %v345
        %v352 = vsub.f32 %v266, %v273
        %v353 = vmul.f32 %v352, 1.442695
        %v354 = vpow.pop %v353
        %v355 = vadd.f32 %v349, %v354
        %vm356 = vcmp.eq.s32.totalorder %v227, 13
        %v357 = vsel %vm356, %v352, %v351
        %v358 = vsub.f32 %v269, %v273
        %v359 = vmul.f32 %v358, 1.442695
        %v360 = vpow.pop %v359
        %v361 = vadd.f32 %v355, %v360
        %vm362 = vcmp.eq.s32.totalorder %v227, 14
        %v363 = vsel %vm362, %v358, %v357
        %v364 = vsub.f32 %v272, %v273
        %v365 = vmul.f32 %v364, 1.442695
        %v366 = vpow.pop %v365
        %v367 = vadd.f32 %v361, %v366
        %vm368 = vcmp.eq.s32.totalorder %v227, 15
        %v369 = vsel %vm368, %v364, %v363
        %v370 = vlog2.pop %v367
        %v371 = vmul.f32 %v370, 0.6931472
        %v372 = vsub.f32 %v371, %v369
        %vm373 = vcmask 1041408
        %v374 = vsel %vm373, %v372, 0.0
        %375 = vadd.xlane.f32.xlu0 %v374
        %v376 = vpop.xlane.xlu0 %375
        %vm377 = vcmask 1024
        %378 = vst.msk [vmem:[%s224] sm:$0x3] %vm377, %v376
        %p379 = scmp.lt.s32.totalorder %s23, 1
        %s380 = scalar_select %p379, %s23, 1
        %p381 = scmp.lt.s32.totalorder %s24, 0
        %s382 = scalar_select %p381, %s24, 0
        %s383 = sadd.s32 %s382, %s380
        %s384 = smul.addr %s383, 2
        %s385 = scalar_lea.vmem %s2, %s384
        // Predicated region
        $region37: #{tpu_custom_call.1} parent=27 // pred_check
          %p386 = pneg %p107
        $region38: #{tpu_custom_call.1} parent=27 // pred_check_branch
          %388 = sbr.rel (%p386) target = $region40
        $region39: #{tpu_custom_call.1} parent=27 // pred_region
          _
        $region40: #{tpu_custom_call.1} parent=27 // pred_fallthru
          _
      $region28: #{tpu_custom_call.1} parent=5 // pred_fallthru
        _
      %p389 = scmp.le.s32.totalorder 2, %s14
      // Predicated region
      $region41: #{tpu_custom_call.1} parent=5 // pred_check
        %p390 = pneg %p389
      $region42: #{tpu_custom_call.1} parent=5 // pred_check_branch
        %392 = sbr.rel (%p390) target = $region44
      $region43: #{tpu_custom_call.1} parent=5 // pred_region
        %s393 = ssub.s32 %s14, 2
        // Predicated region
        $region45: #{tpu_custom_call.1} parent=43 // pred_check
          %p394 = pneg %p113
        $region46: #{tpu_custom_call.1} parent=43 // pred_check_branch
          %396 = sbr.rel (%p394) target = $region48
        $region47: #{tpu_custom_call.1} parent=43 // pred_region
          %p397 = scmp.lt.s32.totalorder %s25, 1
          %s398 = scalar_select %p397, %s25, 1
          %p399 = scmp.lt.s32.totalorder %s26, 0
          %s400 = scalar_select %p399, %s26, 0
          %s401 = sadd.s32 %s400, %s398
          %s402 = smul.addr %s401, 2
          %s403 = scalar_lea.vmem %s2, %s402
        $region48: #{tpu_custom_call.1} parent=43 // pred_fallthru
          _
      $region44: #{tpu_custom_call.1} parent=5 // pred_fallthru
        _
    $region6: #{tpu_custom_call.1} parent=1 // loop_footer
      %s18 = sadd.s32 1, %s14
    $region7: #{tpu_custom_call.1} parent=1 // loop_footer_branch
      %13 = sbr.rel target = $region3
    $region8: #{tpu_custom_call.1} parent=1 // loop_exit
      _
    %404 = vsyncpa [#allocation3], 1
    %s405 = scalar_lea.sflag [#allocation3], 1
    %406 = vsyncpa %s405, 1
    %407 = vsyncpa [#allocation5], 1
    %s408 = scalar_lea.sflag [#allocation5], 1
    %409 = vsyncpa %s408, 1

</llo_original>
